<compile_context>
chip_gen: v5e
topology: v5e:2x2
jax: 0.10.0
libtpu: 0.0.40
codegen_flags: <defaults>
</compile_context>

<pallas_src>
import jax
import jax.numpy as jnp
from jax import lax
from jax.experimental import pallas as pl
from jax.experimental.pallas import tpu as pltpu


def cbam_kernel(x_ref, w1_ref, w2_ref, k_ref, bsa_ref, o_ref):
    """One batch element of CBAM.

    x_ref   : (1, C, N)   VMEM  input activations, N = H*W (lane axis)
    w1_ref  : (Chid, C)   VMEM  first 1x1-conv weight  (PyTorch layout)
    w2_ref  : (C, Chid)   VMEM  second 1x1-conv weight (PyTorch layout)
    k_ref   : (2N, N)     VMEM  7x7 spatial conv folded into a dense matrix
    bsa_ref : (1,)        SMEM  spatial-conv bias
    o_ref   : (1, C, N)   VMEM  output
    """
    x = x_ref[0]                         # (C, N)  float32
    C, N = x.shape

    # ---------------- Channel attention ----------------
    # Spatial avg / max pooling per channel -> columns of a (C, 2) matrix.
    s_avg = jnp.sum(x, axis=1, keepdims=True) * (1.0 / N)     # (C, 1)
    s_max = jnp.max(x, axis=1, keepdims=True)                 # (C, 1)
    pooled = jnp.concatenate([s_avg, s_max], axis=1)          # (C, 2)

    # Shared MLP applied to both pooled vectors in one matmul chain.
    h = jnp.dot(w1_ref[...], pooled, preferred_element_type=jnp.float32)  # (Chid, 2)
    h = jnp.maximum(h, 0.0)                                               # ReLU
    mlp = jnp.dot(w2_ref[...], h, preferred_element_type=jnp.float32)     # (C, 2)

    # sigmoid(mlp(avg) + mlp(max))  ==  sigmoid(row-sum of the (C, 2) result)
    ca = jax.nn.sigmoid(jnp.sum(mlp, axis=1, keepdims=True))   # (C, 1)
    x1 = x * ca                                                # (C, N) lane-dense

    # ---------------- Spatial attention ----------------
    a = jnp.sum(x1, axis=0, keepdims=True) * (1.0 / C)         # (1, N) channel mean
    m = jnp.max(x1, axis=0, keepdims=True)                     # (1, N) channel max
    maps = jnp.concatenate([a, m], axis=1)                     # (1, 2N)

    # Entire 7x7 conv (2 in-ch -> 1 out-ch, pad 3) as a single MXU matmul.
    conv = jnp.dot(maps, k_ref[...], preferred_element_type=jnp.float32)  # (1, N)
    sa = jax.nn.sigmoid(conv + bsa_ref[0])                     # (1, N)

    o_ref[0] = (x1 * sa).astype(o_ref.dtype)


def _spatial_conv_matrix(w_sa, H, W):
    """Fold the 7x7 / padding-3 conv (in_ch=2, out_ch=1) into a dense matrix K of
    shape (2*H*W, H*W) such that  conv(cat([avg, max]))[i, j] ==
    (concat([avg.ravel(), max.ravel()]) @ K)[i*W + j]."""
    w = w_sa.reshape(2, 7, 7)
    di = jnp.arange(H)[:, None] - jnp.arange(H)[None, :] + 3    # (H_in, H_out)
    dj = jnp.arange(W)[:, None] - jnp.arange(W)[None, :] + 3    # (W_in, W_out)
    vi = (di >= 0) & (di < 7)
    vj = (dj >= 0) & (dj < 7)
    dic = jnp.clip(di, 0, 6)
    djc = jnp.clip(dj, 0, 6)
    # k[c, p, q, i, j] = w[c, p - i + 3, q - j + 3]   (zero outside the 7x7 window)
    k = w[:, dic[:, None, :, None], djc[None, :, None, :]]      # (2, H, W, H, W)
    valid = vi[:, None, :, None] & vj[None, :, None, :]          # (H, W, H, W)
    k = jnp.where(valid[None], k, 0.0)
    return k.reshape(2 * H * W, H * W)


def cbam_pallas(x, w1, w2, w_sa, b_sa):
    """x: (B, C, H, W) feature map (NCHW, as in the PyTorch module). Returns same shape."""
    B, C, H, W = x.shape
    N = H * W
    Chid = w1.shape[0]

    x_cn = x.reshape(B, C, N)                 # free host-side reshape (no transpose)
    k_mat = _spatial_conv_matrix(w_sa, H, W)  # (2N, N), one-time weight transform

    out = pl.pallas_call(
        cbam_kernel,
        out_shape=jax.ShapeDtypeStruct((B, C, N), x.dtype),
        grid=(B,),
        in_specs=[
            pl.BlockSpec((1, C, N), lambda b: (b, 0, 0)),
            pl.BlockSpec((Chid, C), lambda b: (0, 0)),
            pl.BlockSpec((C, Chid), lambda b: (0, 0)),
            pl.BlockSpec((2 * N, N), lambda b: (0, 0)),
            pl.BlockSpec(memory_space=pltpu.MemorySpace.SMEM),
        ],
        out_specs=pl.BlockSpec((1, C, N), lambda b: (b, 0, 0)),
        compiler_params=pltpu.CompilerParams(
            dimension_semantics=("parallel",),
        ),
    )(x_cn, w1, w2, k_mat, b_sa)

    return out.reshape(B, C, H, W)


def cbam_reference(x, w1, w2, w_sa, b_sa):
    """Pure-JAX reference mirroring the PyTorch Origin_CBAM module (NCHW)."""
    avg = jnp.mean(x, axis=(2, 3))                        # (B, C)
    mx = jnp.max(x, axis=(2, 3))                          # (B, C)

    def mlp(v):
        return jnp.maximum(v @ w1.T, 0.0) @ w2.T

    ca = jax.nn.sigmoid(mlp(avg) + mlp(mx))               # (B, C)
    x1 = x * ca[:, :, None, None]

    a = jnp.mean(x1, axis=1, keepdims=True)
    m = jnp.max(x1, axis=1, keepdims=True)
    cat = jnp.concatenate([a, m], axis=1)                 # (B, 2, H, W)
    conv = lax.conv_general_dilated(
        cat, w_sa, window_strides=(1, 1), padding=((3, 3), (3, 3)),
        dimension_numbers=("NCHW", "OIHW", "NCHW"),
    ) + b_sa.reshape(1, 1, 1, 1)
    sa = jax.nn.sigmoid(conv)                             # (B, 1, H, W)
    return x1 * sa


if __name__ == "__main__":
    # C must be divisible by ratio=16; H*W = 256 keeps the lane axis a multiple
    # of 128 (unmasked stores).
    B, C, H, W = 2, 32, 16, 16
    ratio = 16
    Chid = C // ratio

    key = jax.random.PRNGKey(0)
    k_x, k_w1, k_w2, k_ws, k_bs = jax.random.split(key, 5)

    x = jax.random.normal(k_x, (B, C, H, W), dtype=jnp.float32)
    # ChannelAttentionModule MLP weights (1x1 convs, no bias), PyTorch layout
    w1 = 0.3 * jax.random.normal(k_w1, (Chid, C), dtype=jnp.float32)   # Conv2d(C, C//16, 1)
    w2 = 0.3 * jax.random.normal(k_w2, (C, Chid), dtype=jnp.float32)   # Conv2d(C//16, C, 1)
    # SpatialAttentionModule 7x7 conv weight + bias
    w_sa = 0.1 * jax.random.normal(k_ws, (1, 2, 7, 7), dtype=jnp.float32)
    b_sa = 0.1 * jax.random.normal(k_bs, (1,), dtype=jnp.float32)

    out = cbam_pallas(x, w1, w2, w_sa, b_sa)
    out = jax.block_until_ready(out)

    ref = cbam_reference(x, w1, w2, w_sa, b_sa)
    assert out.shape == (B, C, H, W)
    assert jnp.allclose(out, ref, atol=1e-4, rtol=1e-4), "mismatch vs reference"

    print("KERNEL_OK")
</pallas_src>

<mosaic_0001>
module attributes {stable_mosaic.version = 11 : i64} {
  func.func @cbam_kernel(%arg0: i32, %arg1: memref<1x32x256xf32, #tpu.memory_space<vmem>>, %arg2: memref<2x32xf32, #tpu.memory_space<vmem>>, %arg3: memref<32x2xf32, #tpu.memory_space<vmem>>, %arg4: memref<512x256xf32, #tpu.memory_space<vmem>>, %arg5: memref<1xf32, #tpu.memory_space<smem>>, %arg6: memref<1x32x256xf32, #tpu.memory_space<vmem>>) attributes {dimension_semantics = [#tpu.dimension_semantics<parallel>], iteration_bounds = array<i64: 2>, scalar_prefetch = 0 : i64, scratch_operands = 0 : i64, tpu.core_type = #tpu.core_type<tc>, window_params = [{transform_indices = @transform_0, window_bounds = array<i64: 1, 32, 256>}, {pipeline_mode = #tpu.pipeline_mode<synchronous>, transform_indices = @transform_1, window_bounds = array<i64: 2, 32>}, {pipeline_mode = #tpu.pipeline_mode<synchronous>, transform_indices = @transform_2, window_bounds = array<i64: 32, 2>}, {pipeline_mode = #tpu.pipeline_mode<synchronous>, transform_indices = @transform_3, window_bounds = array<i64: 512, 256>}, {transform_indices = @transform_4, window_bounds = array<i64: 1>}, {transform_indices = @transform_5, window_bounds = array<i64: 1, 32, 256>}]} {
    %c0 = arith.constant 0 : index
    %c0_0 = arith.constant 0 : index
    %c0_1 = arith.constant 0 : index
    %0 = vector.load %arg1[%c0, %c0_0, %c0_1] : memref<1x32x256xf32, #tpu.memory_space<vmem>>, vector<1x32x256xf32>
    %1 = vector.shape_cast %0 : vector<1x32x256xf32> to vector<32x256xf32>
    %cst = arith.constant dense<0.000000e+00> : vector<32xf32>
    %2 = vector.multi_reduction <add>, %1, %cst [1] : vector<32x256xf32> to vector<32xf32>
    %3 = vector.shape_cast %2 : vector<32xf32> to vector<32x1xf32>
    %cst_2 = arith.constant 3.906250e-03 : f32
    %4 = vector.broadcast %cst_2 : f32 to vector<32x1xf32>
    %5 = arith.mulf %3, %4 : vector<32x1xf32>
    %cst_3 = arith.constant dense<0xFF800000> : vector<32xf32>
    %6 = vector.multi_reduction <maximumf>, %1, %cst_3 [1] : vector<32x256xf32> to vector<32xf32>
    %7 = vector.shape_cast %6 : vector<32xf32> to vector<32x1xf32>
    %8 = tpu.concatenate %5, %7 in 1 : vector<32x1xf32>, vector<32x1xf32> -> vector<32x2xf32>
    %c0_4 = arith.constant 0 : index
    %c0_5 = arith.constant 0 : index
    %9 = vector.load %arg2[%c0_4, %c0_5] : memref<2x32xf32, #tpu.memory_space<vmem>>, vector<2x32xf32>
    %cst_6 = arith.constant dense<0.000000e+00> : vector<2x2xf32>
    %10 = tpu.matmul %9, %8, %cst_6 {dimension_numbers = #tpu.dot_dimension_numbers<[1], [0], [0], [1], [0, 0, 1, 1], [], []>} : vector<2x32xf32>, vector<32x2xf32>, vector<2x2xf32> -> vector<2x2xf32>
    %cst_7 = arith.constant 0.000000e+00 : f32
    %11 = vector.broadcast %cst_7 : f32 to vector<2x2xf32>
    %12 = arith.maximumf %10, %11 : vector<2x2xf32>
    %c0_8 = arith.constant 0 : index
    %c0_9 = arith.constant 0 : index
    %13 = vector.load %arg3[%c0_8, %c0_9] : memref<32x2xf32, #tpu.memory_space<vmem>>, vector<32x2xf32>
    %cst_10 = arith.constant dense<0.000000e+00> : vector<32x2xf32>
    %14 = tpu.matmul %13, %12, %cst_10 {dimension_numbers = #tpu.dot_dimension_numbers<[1], [0], [0], [1], [0, 0, 1, 1], [], []>} : vector<32x2xf32>, vector<2x2xf32>, vector<32x2xf32> -> vector<32x2xf32>
    %cst_11 = arith.constant dense<0.000000e+00> : vector<32xf32>
    %15 = vector.multi_reduction <add>, %14, %cst_11 [1] : vector<32x2xf32> to vector<32xf32>
    %16 = vector.shape_cast %15 : vector<32xf32> to vector<32x1xf32>
    %17 = arith.negf %16 : vector<32x1xf32>
    %18 = math.exp %17 : vector<32x1xf32>
    %cst_12 = arith.constant 1.000000e+00 : f32
    %19 = vector.broadcast %cst_12 : f32 to vector<32x1xf32>
    %20 = arith.addf %19, %18 : vector<32x1xf32>
    %21 = arith.divf %19, %20 : vector<32x1xf32>
    %22 = vector.broadcast %21 : vector<32x1xf32> to vector<32x256xf32>
    %23 = arith.mulf %1, %22 : vector<32x256xf32>
    %cst_13 = arith.constant dense<0.000000e+00> : vector<256xf32>
    %24 = vector.multi_reduction <add>, %23, %cst_13 [0] : vector<32x256xf32> to vector<256xf32>
    %25 = vector.shape_cast %24 : vector<256xf32> to vector<1x256xf32>
    %cst_14 = arith.constant 3.125000e-02 : f32
    %26 = vector.broadcast %cst_14 : f32 to vector<1x256xf32>
    %27 = arith.mulf %25, %26 : vector<1x256xf32>
    %cst_15 = arith.constant dense<0xFF800000> : vector<256xf32>
    %28 = vector.multi_reduction <maximumf>, %23, %cst_15 [0] : vector<32x256xf32> to vector<256xf32>
    %29 = vector.shape_cast %28 : vector<256xf32> to vector<1x256xf32>
    %30 = tpu.concatenate %27, %29 in 1 : vector<1x256xf32>, vector<1x256xf32> -> vector<1x512xf32>
    %c0_16 = arith.constant 0 : index
    %c0_17 = arith.constant 0 : index
    %31 = vector.load %arg4[%c0_16, %c0_17] : memref<512x256xf32, #tpu.memory_space<vmem>>, vector<512x256xf32>
    %cst_18 = arith.constant dense<0.000000e+00> : vector<1x256xf32>
    %32 = tpu.matmul %30, %31, %cst_18 {dimension_numbers = #tpu.dot_dimension_numbers<[1], [0], [0], [1], [0, 0, 1, 1], [], []>} : vector<1x512xf32>, vector<512x256xf32>, vector<1x256xf32> -> vector<1x256xf32>
    %c0_19 = arith.constant 0 : index
    %33 = memref.load %arg5[%c0_19] : memref<1xf32, #tpu.memory_space<smem>>
    %34 = vector.broadcast %33 : f32 to vector<1x256xf32>
    %35 = arith.addf %32, %34 : vector<1x256xf32>
    %36 = arith.negf %35 : vector<1x256xf32>
    %37 = math.exp %36 : vector<1x256xf32>
    %cst_20 = arith.constant 1.000000e+00 : f32
    %38 = vector.broadcast %cst_20 : f32 to vector<1x256xf32>
    %39 = arith.addf %38, %37 : vector<1x256xf32>
    %40 = arith.divf %38, %39 : vector<1x256xf32>
    %41 = vector.broadcast %40 : vector<1x256xf32> to vector<32x256xf32>
    %42 = arith.mulf %23, %41 : vector<32x256xf32>
    %c0_21 = arith.constant 0 : index
    %c0_22 = arith.constant 0 : index
    %c0_23 = arith.constant 0 : index
    %43 = vector.load %arg6[%c0_21, %c0_22, %c0_23] : memref<1x32x256xf32, #tpu.memory_space<vmem>>, vector<1x32x256xf32>
    %44 = vector.shape_cast %43 : vector<1x32x256xf32> to vector<32x256xf32>
    %45 = vector.shape_cast %42 : vector<32x256xf32> to vector<1x32x256xf32>
    tpu.vector_store %arg6[%c0_21, %c0_22, %c0_23], %45 {strides = array<i32>} : memref<1x32x256xf32, #tpu.memory_space<vmem>>, vector<1x32x256xf32>,
    return
  }
  func.func @transform_0(%arg0: i32) -> (i32, i32, i32) {
    %c0_i32 = arith.constant 0 : i32
    %c0_i32_0 = arith.constant 0 : i32
    %c0_i32_1 = arith.constant 0 : i32
    return %arg0, %c0_i32, %c0_i32_0 : i32, i32, i32
  }
  func.func @transform_1(%arg0: i32) -> (i32, i32) {
    %c0_i32 = arith.constant 0 : i32
    %c0_i32_0 = arith.constant 0 : i32
    %c0_i32_1 = arith.constant 0 : i32
    return %c0_i32, %c0_i32_0 : i32, i32
  }
  func.func @transform_2(%arg0: i32) -> (i32, i32) {
    %c0_i32 = arith.constant 0 : i32
    %c0_i32_0 = arith.constant 0 : i32
    %c0_i32_1 = arith.constant 0 : i32
    return %c0_i32, %c0_i32_0 : i32, i32
  }
  func.func @transform_3(%arg0: i32) -> (i32, i32) {
    %c0_i32 = arith.constant 0 : i32
    %c0_i32_0 = arith.constant 0 : i32
    %c0_i32_1 = arith.constant 0 : i32
    return %c0_i32, %c0_i32_0 : i32, i32
  }
  func.func @transform_4(%arg0: i32) -> i32 {
    %c0_i32 = arith.constant 0 : i32
    %c0_i32_0 = arith.constant 0 : i32
    return %c0_i32 : i32
  }
  func.func @transform_5(%arg0: i32) -> (i32, i32, i32) {
    %c0_i32 = arith.constant 0 : i32
    %c0_i32_0 = arith.constant 0 : i32
    %c0_i32_1 = arith.constant 0 : i32
    return %arg0, %c0_i32, %c0_i32_0 : i32, i32, i32
  }
}

</mosaic_0001>

<llo_original>
// kernel: tpu_custom_call.1
$region0: #{tpu_custom_call.1}
  #allocation0 [shape = 'u32[]', space=smem, size = 0x4, offset = 0x4, fixed_abs, tag = 'smem constant byte address 0x4 - core index']
  #allocation1 [shape = 'u32[72,128]{1,0:T(1,128)}', space=vmem, size = 0x9000, scoped, tag = 'internal scratch']
  #allocation2 [shape = 'f32[1]{0:T(128)S(6)}', space=smem, size = 0x200, scoped, tag = 'scoped memory for tpu_custom_call.1']
  %s0 = inlined_call_operand.hbm [shape: f32[2,32,256], index: 0, kind: input, shape index: {}]
  %s1 = inlined_call_operand.vmem [shape: f32[2,32], index: 1, kind: input, shape index: {}]
  %s2 = inlined_call_operand.vmem [shape: f32[32,2], index: 2, kind: input, shape index: {}]
  %s3 = inlined_call_operand.hbm [shape: f32[512,256], index: 3, kind: input, shape index: {}]
  %s4 = inlined_call_operand.<no memory space> [shape: f32[1], index: 4, kind: input, shape index: {}]
  %s5 = inlined_call_operand.hbm [shape: f32[2,32,256], index: 5, kind: output, shape index: {}]
  %s6 = sld [smem:[#allocation0]]
  $region61: #{tpu_custom_call.1} parent=0
    _
  %s8 = ssub.s32 1, %s6
  %s9 = scalar_select 0, %s8, %s6
  %10 = sst [smem:[#allocation2]] %s4
  $region1: #{tpu_custom_call.1} parent=0
    #allocation3 [shape = 'u8[65536]{0}', space=vmem, size = 0x10000, scoped, tag = 'input window, operand 0']
    #allocation4 [shape = 's32[2]{0}', space=sflag, size = 0x8, scoped, tag = 'scoped memory for tpu_custom_call.1']
    #allocation5 [shape = 's32[2]{0}', space=sflag, size = 0x8, scoped, tag = 'scoped memory for tpu_custom_call.1']
    #allocation6 [shape = 'u8[524288]{0}', space=vmem, size = 0x80000, scoped, tag = 'input window, operand 3, single buffered']
    #allocation7 [shape = 's32[1]{0}', space=sflag, size = 0x4, scoped, tag = 'scoped memory for tpu_custom_call.1']
    #allocation8 [shape = 'u8[65536]{0}', space=vmem, size = 0x10000, scoped, tag = 'output window, operand 0']
    %11 = vsyncpa [#allocation4], 0
    %s12 = scalar_lea.sflag [#allocation4], 1
    %13 = vsyncpa %s12, 0
    %14 = vsyncpa [#allocation7], 0
    %15 = vsyncpa [#allocation5], 0
    %s16 = scalar_lea.sflag [#allocation5], 1
    %17 = vsyncpa %s16, 0
    loop: start=0, step=1, limit=4
    $region2: #{tpu_custom_call.1} parent=1 // loop_pre_header
      _
    $region3: #{tpu_custom_call.1} parent=1 // loop_header
      %s19 = sphi 0, %s23
      %p20 = scmp.ge.s32.totalorder %s19, 4
      %s29 = sphi 0, %s31
      %s32 = sphi 0, %s29
      %s33 = sphi 0, %s32
      %s49 = sphi 0, %s33
      %s53 = sphi 0, %s53
      %s55 = sphi 0, %s53
      %s56 = sphi 0, %s55
      %s70 = sphi 0, %s56
      %s74 = sphi 0, %s74
      %s76 = sphi 0, %s74
      %s77 = sphi 0, %s76
      %s91 = sphi 0, %s77
      %s95 = sphi 0, %s95
      %s97 = sphi 0, %s95
      %s98 = sphi 0, %s97
      %s112 = sphi 0, %s98
      %s116 = sphi 0, %s116
      %s118 = sphi 0, %s116
      %s119 = sphi 0, %s118
      %s133 = sphi 0, %s119
      %s139 = sphi 0, %s141
      %s142 = sphi 0, %s139
      %s143 = sphi 0, %s142
      %s159 = sphi 0, %s143
    $region4: #{tpu_custom_call.1} parent=1 // loop_header_branch
      %22 = sbr.rel (%p20) target = $region8
    $region5: #{tpu_custom_call.1} parent=1 // loop_body
      %s24 = ssub.s32 %s19, 1
      %s25 = ssub.s32 %s19, 2
      %s26 = sadd.s32 %s19, 1
      %s27 = ssub.s32 %s19, %s26
      %p28 = scmp.eq.s32.totalorder %s27, 0
      %s30 = sadd.s32 %s29, 1
      %s31 = scalar_select %p28, %s29, %s30
      %p34 = pneg %p28
      %p35 = scmp.eq.s32.totalorder %s19, 1
      %p36 = por %p34, %p35
      %p37 = scmp.ne.s32.totalorder %s29, %s32
      %p38 = scmp.eq.s32.totalorder %s19, 0
      %p39 = por %p37, %p38
      %p40 = scmp.ne.s32.totalorder %s29, %s32
      %p41 = scmp.eq.s32.totalorder %s24, 1
      %p42 = por %p40, %p41
      %p43 = scmp.ne.s32.totalorder %s32, %s33
      %p44 = scmp.eq.s32.totalorder %s24, 0
      %p45 = por %p43, %p44
      %p46 = scmp.ne.s32.totalorder %s32, %s33
      %p47 = scmp.eq.s32.totalorder %s25, 1
      %p48 = por %p46, %p47
      %p50 = scmp.ne.s32.totalorder %s33, %s49
      %p51 = scmp.eq.s32.totalorder %s25, 0
      %p52 = por %p50, %p51
      %s54 = sadd.s32 %s53, 1
      %p57 = scmp.eq.s32.totalorder %s19, 1
      %p58 = scmp.ne.s32.totalorder %s53, %s55
      %p59 = scmp.eq.s32.totalorder %s19, 0
      %p60 = por %p58, %p59
      %p61 = scmp.ne.s32.totalorder %s53, %s55
      %p62 = scmp.eq.s32.totalorder %s24, 1
      %p63 = por %p61, %p62
      %p64 = scmp.ne.s32.totalorder %s55, %s56
      %p65 = scmp.eq.s32.totalorder %s24, 0
      %p66 = por %p64, %p65
      %p67 = scmp.ne.s32.totalorder %s55, %s56
      %p68 = scmp.eq.s32.totalorder %s25, 1
      %p69 = por %p67, %p68
      %p71 = scmp.ne.s32.totalorder %s56, %s70
      %p72 = scmp.eq.s32.totalorder %s25, 0
      %p73 = por %p71, %p72
      %s75 = sadd.s32 %s74, 1
      %p78 = scmp.eq.s32.totalorder %s19, 1
      %p79 = scmp.ne.s32.totalorder %s74, %s76
      %p80 = scmp.eq.s32.totalorder %s19, 0
      %p81 = por %p79, %p80
      %p82 = scmp.ne.s32.totalorder %s74, %s76
      %p83 = scmp.eq.s32.totalorder %s24, 1
      %p84 = por %p82, %p83
      %p85 = scmp.ne.s32.totalorder %s76, %s77
      %p86 = scmp.eq.s32.totalorder %s24, 0
      %p87 = por %p85, %p86
      %p88 = scmp.ne.s32.totalorder %s76, %s77
      %p89 = scmp.eq.s32.totalorder %s25, 1
      %p90 = por %p88, %p89
      %p92 = scmp.ne.s32.totalorder %s77, %s91
      %p93 = scmp.eq.s32.totalorder %s25, 0
      %p94 = por %p92, %p93
      %s96 = sadd.s32 %s95, 1
      %p99 = scmp.eq.s32.totalorder %s19, 1
      %p100 = scmp.ne.s32.totalorder %s95, %s97
      %p101 = scmp.eq.s32.totalorder %s19, 0
      %p102 = por %p100, %p101
      %p103 = scmp.ne.s32.totalorder %s95, %s97
      %p104 = scmp.eq.s32.totalorder %s24, 1
      %p105 = por %p103, %p104
      %p106 = scmp.ne.s32.totalorder %s97, %s98
      %p107 = scmp.eq.s32.totalorder %s24, 0
      %p108 = por %p106, %p107
      %p109 = scmp.ne.s32.totalorder %s97, %s98
      %p110 = scmp.eq.s32.totalorder %s25, 1
      %p111 = por %p109, %p110
      %p113 = scmp.ne.s32.totalorder %s98, %s112
      %p114 = scmp.eq.s32.totalorder %s25, 0
      %p115 = por %p113, %p114
      %s117 = sadd.s32 %s116, 1
      %p120 = scmp.eq.s32.totalorder %s19, 1
      %p121 = scmp.ne.s32.totalorder %s116, %s118
      %p122 = scmp.eq.s32.totalorder %s19, 0
      %p123 = por %p121, %p122
      %p124 = scmp.ne.s32.totalorder %s116, %s118
      %p125 = scmp.eq.s32.totalorder %s24, 1
      %p126 = por %p124, %p125
      %p127 = scmp.ne.s32.totalorder %s118, %s119
      %p128 = scmp.eq.s32.totalorder %s24, 0
      %p129 = por %p127, %p128
      %p130 = scmp.ne.s32.totalorder %s118, %s119
      %p131 = scmp.eq.s32.totalorder %s25, 1
      %p132 = por %p130, %p131
      %p134 = scmp.ne.s32.totalorder %s119, %s133
      %p135 = scmp.eq.s32.totalorder %s25, 0
      %p136 = por %p134, %p135
      %s137 = ssub.s32 %s19, %s26
      %p138 = scmp.eq.s32.totalorder %s137, 0
      %s140 = sadd.s32 %s139, 1
      %s141 = scalar_select %p138, %s139, %s140
      %p144 = pneg %p138
      %p145 = scmp.eq.s32.totalorder %s19, 1
      %p146 = por %p144, %p145
      %p147 = scmp.ne.s32.totalorder %s139, %s142
      %p148 = scmp.eq.s32.totalorder %s19, 0
      %p149 = por %p147, %p148
      %p150 = scmp.ne.s32.totalorder %s139, %s142
      %p151 = scmp.eq.s32.totalorder %s24, 1
      %p152 = por %p150, %p151
      %p153 = scmp.ne.s32.totalorder %s142, %s143
      %p154 = scmp.eq.s32.totalorder %s24, 0
      %p155 = por %p153, %p154
      %p156 = scmp.ne.s32.totalorder %s142, %s143
      %p157 = scmp.eq.s32.totalorder %s25, 1
      %p158 = por %p156, %p157
      %p160 = scmp.ne.s32.totalorder %s143, %s159
      %p161 = scmp.eq.s32.totalorder %s25, 0
      %p162 = por %p160, %p161
      %p163 = scmp.le.s32.totalorder 1, %s19
      %p164 = scmp.lt.s32.totalorder %s19, 3
      %p165 = pnand %p163, %p164
      %p166 = pneg %p165
      // Predicated region
      $region9: #{tpu_custom_call.1} parent=5 // pred_check
        _
      $region10: #{tpu_custom_call.1} parent=5 // pred_check_branch
        %168 = sbr.rel (%p165) target = $region12
      $region11: #{tpu_custom_call.1} parent=5 // pred_region
        %s169 = ssub.s32 %s19, 1
        // Predicated region
        $region13: #{tpu_custom_call.1} parent=11 // pred_check
          %p170 = pneg %p66
        $region14: #{tpu_custom_call.1} parent=11 // pred_check_branch
          %172 = sbr.rel (%p170) target = $region16
        $region15: #{tpu_custom_call.1} parent=11 // pred_region
          _
        $region16: #{tpu_custom_call.1} parent=11 // pred_fallthru
          _
        // Predicated region
        $region17: #{tpu_custom_call.1} parent=11 // pred_check
          %p173 = pneg %p87
        $region18: #{tpu_custom_call.1} parent=11 // pred_check_branch
          %175 = sbr.rel (%p173) target = $region20
        $region19: #{tpu_custom_call.1} parent=11 // pred_region
          _
        $region20: #{tpu_custom_call.1} parent=11 // pred_fallthru
          _
        // Predicated region
        $region21: #{tpu_custom_call.1} parent=11 // pred_check
          %p176 = pneg %p108
        $region22: #{tpu_custom_call.1} parent=11 // pred_check_branch
          %178 = sbr.rel (%p176) target = $region24
        $region23: #{tpu_custom_call.1} parent=11 // pred_region
          %180 = vsyncadd [#allocation7], 0
          %s181 = sshll.u32 %s3, 4
          %s182 = int_to_ptr.hbm [resolvable:$true] %s181
          %s183 = sshll.u32 [#allocation6], 4
          %s184 = int_to_ptr.vmem [resolvable:$true] %s183
          %189 = dma.hbm_to_vmem [thread:$0]  %s182, 16384, %s184, [#allocation7], 256, 256, 16
        $region24: #{tpu_custom_call.1} parent=11 // pred_fallthru
          _
        // Predicated region
        $region25: #{tpu_custom_call.1} parent=11 // pred_check
          %p190 = pneg %p129
        $region26: #{tpu_custom_call.1} parent=11 // pred_check_branch
          %192 = sbr.rel (%p190) target = $region28
        $region27: #{tpu_custom_call.1} parent=11 // pred_region
          _
        $region28: #{tpu_custom_call.1} parent=11 // pred_fallthru
          _
      $region12: #{tpu_custom_call.1} parent=5 // pred_fallthru
        _
      %p193 = scmp.lt.s32.totalorder %s19, 2
      // Predicated region
      $region29: #{tpu_custom_call.1} parent=5 // pred_check
        %p194 = pneg %p193
      $region30: #{tpu_custom_call.1} parent=5 // pred_check_branch
        %196 = sbr.rel (%p194) target = $region32
      $region31: #{tpu_custom_call.1} parent=5 // pred_region
        // Predicated region
        $region33: #{tpu_custom_call.1} parent=31 // pred_check
          %p197 = pneg %p39
        $region34: #{tpu_custom_call.1} parent=31 // pred_check_branch
          %199 = sbr.rel (%p197) target = $region36
        $region35: #{tpu_custom_call.1} parent=31 // pred_region
          %s200 = sand.u32 %s29, 1
          %s201 = scalar_lea.sflag [#allocation4], %s200
          %s202 = sand.u32 %s29, 1
          %s203 = smul.addr %s202, 64
          %s204 = scalar_lea.vmem [#allocation3], %s203
          %206 = vsyncadd %s201, 0
          %s207 = smul.addr %s19, 8
          %s208 = smul.addr %s207, 8
          %s209 = scalar_lea.hbm %s0, %s208
          %s210 = sshll.u32 %s209, 4
          %s211 = int_to_ptr.hbm [resolvable:$true] %s210
          %s212 = sshll.u32 %s204, 4
          %s213 = int_to_ptr.vmem [resolvable:$true] %s212
          %218 = dma.hbm_to_vmem [thread:$0]  %s211, 1024, %s213, %s201, 256, 256, 16
        $region36: #{tpu_custom_call.1} parent=31 // pred_fallthru
          _
      $region32: #{tpu_custom_call.1} parent=5 // pred_fallthru
        _
      %p219 = scmp.le.s32.totalorder 1, %s19
      %p220 = scmp.lt.s32.totalorder %s19, 3
      %p221 = pnand %p219, %p220
      %p222 = pneg %p221
      // Predicated region
      $region37: #{tpu_custom_call.1} parent=5 // pred_check
        _
      $region38: #{tpu_custom_call.1} parent=5 // pred_check_branch
        %224 = sbr.rel (%p221) target = $region40
      $region39: #{tpu_custom_call.1} parent=5 // pred_region
        %s225 = ssub.s32 %s19, 1
        %s226 = sand.u32 %s32, 1
        %s227 = scalar_lea.sflag [#allocation4], %s226
        %s228 = sand.u32 %s32, 1
        %s229 = smul.addr %s228, 64
        %s230 = scalar_lea.vmem [#allocation3], %s229
        // Predicated region
        $region41: #{tpu_custom_call.1} parent=39 // pred_check
          %p231 = pneg %p45
        $region42: #{tpu_custom_call.1} parent=39 // pred_check_branch
          %233 = sbr.rel (%p231) target = $region44
        $region43: #{tpu_custom_call.1} parent=39 // pred_region
          %235 = dma.done %s227, 1024
        $region44: #{tpu_custom_call.1} parent=39 // pred_fallthru
          _
        // Predicated region
        $region45: #{tpu_custom_call.1} parent=39 // pred_check
          %p236 = pneg %p108
        $region46: #{tpu_custom_call.1} parent=39 // pred_check_branch
          %238 = sbr.rel (%p236) target = $region48
        $region47: #{tpu_custom_call.1} parent=39 // pred_region
          %240 = dma.done [#allocation7], 16384
        $region48: #{tpu_custom_call.1} parent=39 // pred_fallthru
          _
        %s241 = sand.u32 %s32, 1
        %s242 = scalar_lea.sflag [#allocation4], %s241
        %s243 = sand.u32 %s32, 1
        %s244 = smul.addr %s243, 64
        %s245 = scalar_lea.vmem [#allocation3], %s244
        %p246 = pneg %p45
        %p247 = pneg %p42
        %p248 = pneg %p66
        %p249 = pneg %p63
        %p250 = pneg %p87
        %p251 = pneg %p84
        %p252 = pneg %p108
        %p253 = pneg %p105
        %p254 = pneg %p129
        %p255 = pneg %p126
        %p256 = pneg %p155
        %p257 = pneg %p152
        %s258 = sand.u32 %s142, 1
        %s259 = scalar_lea.sflag [#allocation5], %s258
        %s260 = sand.u32 %s142, 1
        %s261 = smul.addr %s260, 64
        %s262 = scalar_lea.vmem [#allocation8], %s261
        %v263 = vld [vmem:[%s230] sm:$0xff]
        %v264 = vld [vmem:[%s230 + $0x8] sm:$0xff]
        %v265 = vld [vmem:[%s230 + $0x10] sm:$0xff]
        %v266 = vld [vmem:[%s230 + $0x18] sm:$0xff]
        %v267 = vld [vmem:[%s230 + $0x20] sm:$0xff]
        %v268 = vld [vmem:[%s230 + $0x28] sm:$0xff]
        %v269 = vld [vmem:[%s230 + $0x30] sm:$0xff]
        %v270 = vld [vmem:[%s230 + $0x38] sm:$0xff]
        %v271 = vadd.f32 %v263, %v264
        %272 = vadd.xlane.f32.xlu0 %v271
        %v273 = vpop.xlane.xlu0 %272
        %v274 = vadd.f32 %v265, %v266
        %275 = vadd.xlane.f32.xlu0 %v274
        %v276 = vpop.xlane.xlu0 %275
        %v277 = vadd.f32 %v267, %v268
        %278 = vadd.xlane.f32.xlu0 %v277
        %v279 = vpop.xlane.xlu0 %278
        %v280 = vadd.f32 %v269, %v270
        %281 = vadd.xlane.f32.xlu0 %v280
        %v282 = vpop.xlane.xlu0 %281
        %v283 = vmul.f32 %v273, 0.00390625
        %v284 = vmul.f32 %v276, 0.00390625
        %v285 = vmul.f32 %v279, 0.00390625
        %v286 = vmul.f32 %v282, 0.00390625
        %v287 = vmax.f32 %v263, %v264
        %288 = vmax.xlane.f32.xlu0 %v287
        %v289 = vpop.xlane.xlu0 %288
        %v290 = vmax.f32 %v265, %v266
        %291 = vmax.xlane.f32.xlu0 %v290
        %v292 = vpop.xlane.xlu0 %291
        %v293 = vmax.f32 %v267, %v268
        %294 = vmax.xlane.f32.xlu0 %v293
        %v295 = vpop.xlane.xlu0 %294
        %v296 = vmax.f32 %v269, %v270
        %297 = vmax.xlane.f32.xlu0 %v296
        %v298 = vpop.xlane.xlu0 %297
        %vm299 = vcmask 7168
        %v300 = vsel %vm299, %v283, %v289
        %v301 = vsel %vm299, %v284, %v292
        %v302 = vsel %vm299, %v285, %v295
        %v303 = vsel %vm299, %v286, %v298
        %v304 = vld [vmem:[%s1] sm:$0x3]
        %vm305 = vcmask 261120
        %v307 = vsel %vm305, %v304, 0
        %309 = vmatpush.msra.mxu0 0.0
        %310 = vmatpush.msra.mxu0 0.0
        %311 = vmatpush.msra.mxu0 0.0
        %312 = vmatpush.msra.mxu0 0.0
        %313 = vmatpush.msra.mxu0 0.0
        %314 = vmatpush.msra.mxu0 0.0
        %315 = vmatpush.msra.mxu0 0.0
        %316 = vmatpush.msra.mxu0 0.0
        %317 = vmatpush.msra.mxu0 0.0
        %318 = vmatpush.msra.mxu0 0.0
        %319 = vmatpush.msra.mxu0 0.0
        %320 = vmatpush.msra.mxu0 0.0
        %321 = vmatpush.msra.mxu0 %v303
        %322 = vmatpush.msra.mxu0 %v302
        %323 = vmatpush.msra.mxu0 %v301
        %324 = vmatpush.msra.mxu0 %v300
        %325 = vmatmul.f32.gmra.mxu0 %v307
        %v326 = vpop.f32.mrf.mxu0
        %v327 = vadd.f32 0.0, %v326
        %328 = vdwg.mxu0
        %v329 = vmax.f32 %v327, 0.0
        %v330 = vld [vmem:[%s2] sm:$0xff]
        %v331 = vld [vmem:[%s2 + $0x8] sm:$0xff]
        %v332 = vld [vmem:[%s2 + $0x10] sm:$0xff]
        %v333 = vld [vmem:[%s2 + $0x18] sm:$0xff]
        %vm334 = vcmask 15360
        %v336 = vsel %vm334, %v330, 0
        %v339 = vsel %vm334, %v331, 0
        %v342 = vsel %vm334, %v332, 0
        %v345 = vsel %vm334, %v333, 0
        %vm347 = vcmask 1041408
        %v349 = vsel %vm347, %v329, 0
        %351 = vmatpush.msra.mxu0 0.0
        %352 = vmatpush.msra.mxu0 0.0
        %353 = vmatpush.msra.mxu0 0.0
        %354 = vmatpush.msra.mxu0 0.0
        %355 = vmatpush.msra.mxu0 0.0
        %356 = vmatpush.msra.mxu0 0.0
        %357 = vmatpush.msra.mxu0 0.0
        %358 = vmatpush.msra.mxu0 0.0
        %359 = vmatpush.msra.mxu0 0.0
        %360 = vmatpush.msra.mxu0 0.0
        %361 = vmatpush.msra.mxu0 0.0
        %362 = vmatpush.msra.mxu0 0.0
        %363 = vmatpush.msra.mxu0 0.0
        %364 = vmatpush.msra.mxu0 0.0
        %365 = vmatpush.msra.mxu0 0.0
        %366 = vmatpush.msra.mxu0 %v349
        %367 = vmatmul.f32.gmra.mxu0 %v336
        %v368 = vpop.f32.mrf.mxu0
        %v369 = vadd.f32 0.0, %v368
        %370 = vmatmul.f32.gmra.mxu0 %v339
        %v371 = vpop.f32.mrf.mxu0
        %v372 = vadd.f32 0.0, %v371
        %373 = vmatmul.f32.gmra.mxu0 %v342
        %v374 = vpop.f32.mrf.mxu0
        %v375 = vadd.f32 0.0, %v374
        %376 = vmatmul.f32.gmra.mxu0 %v345
        %v377 = vpop.f32.mrf.mxu0
        %v378 = vadd.f32 0.0, %v377
        %379 = vdwg.mxu0
        %v380 = vsel %vm334, %v369, 0.0
        %381 = vadd.xlane.f32.xlu0 %v380
        %v382 = vpop.xlane.xlu0 %381
        %v383 = vsel %vm334, %v372, 0.0
        %384 = vadd.xlane.f32.xlu0 %v383
        %v385 = vpop.xlane.xlu0 %384
        %v386 = vsel %vm334, %v375, 0.0
        %387 = vadd.xlane.f32.xlu0 %v386
        %v388 = vpop.xlane.xlu0 %387
        %v389 = vsel %vm334, %v378, 0.0
        %390 = vadd.xlane.f32.xlu0 %v389
        %v391 = vpop.xlane.xlu0 %390
        %v392 = vxor.u32 %v382, 2147483648
        %v393 = vxor.u32 %v385, 2147483648
        %v394 = vxor.u32 %v388, 2147483648
        %v395 = vxor.u32 %v391, 2147483648
        %v396 = vmul.f32 %v392, 1.442695
        %v397 = vpow.pop %v396
        %v398 = vmul.f32 %v393, 1.442695
        %v399 = vpow.pop %v398
        %v400 = vmul.f32 %v394, 1.442695
        %v401 = vpow.pop %v400
        %v402 = vmul.f32 %v395, 1.442695
        %v403 = vpow.pop %v402
        %v404 = vadd.f32 %v397, 1.0
        %v405 = vadd.f32 %v399, 1.0
        %v406 = vadd.f32 %v401, 1.0
        %v407 = vadd.f32 %v403, 1.0
        %v408 = vrcp.pop %v404
        %v409 = vmul.f32 %v404, %v408
        %v410 = vsub.f32 1.0, %v409
        %v411 = vmul.f32 %v408, %v410
        %v412 = vadd.f32 %v408, %v411
        %vm413 = vweird.f32 %v404
        %vm414 = vweird.f32 %v408
        %vm415 = vmor %vm413, %vm414
        %v416 = vsel %vm415, %v408, %v412
        %v417 = vand.u32 2147483647, %v404
        %vm418 = vcmp.eq.f32.partialorder %v417, 8.507059e+37
        %v419 = vand.u32 %v404, 2147483648
        %v420 = vor.u32 1.1754944e-38, %v419
        %v421 = vsel %vm418, %v420, %v416
        %v422 = vmul.f32 1.0, %v421
        %v423 = vrcp.pop %v405
        %v424 = vmul.f32 %v405, %v423
        %v425 = vsub.f32 1.0, %v424
        %v426 = vmul.f32 %v423, %v425
        %v427 = vadd.f32 %v423, %v426
        %vm428 = vweird.f32 %v405
        %vm429 = vweird.f32 %v423
        %vm430 = vmor %vm428, %vm429
        %v431 = vsel %vm430, %v423, %v427
        %v432 = vand.u32 2147483647, %v405
        %vm433 = vcmp.eq.f32.partialorder %v432, 8.507059e+37
        %v434 = vand.u32 %v405, 2147483648
        %v435 = vor.u32 1.1754944e-38, %v434
        %v436 = vsel %vm433, %v435, %v431
        %v437 = vmul.f32 1.0, %v436
        %v438 = vrcp.pop %v406
        %v439 = vmul.f32 %v406, %v438
        %v440 = vsub.f32 1.0, %v439
        %v441 = vmul.f32 %v438, %v440
        %v442 = vadd.f32 %v438, %v441
        %vm443 = vweird.f32 %v406
        %vm444 = vweird.f32 %v438
        %vm445 = vmor %vm443, %vm444
        %v446 = vsel %vm445, %v438, %v442
        %v447 = vand.u32 2147483647, %v406
        %vm448 = vcmp.eq.f32.partialorder %v447, 8.507059e+37
        %v449 = vand.u32 %v406, 2147483648
        %v450 = vor.u32 1.1754944e-38, %v449
        %v451 = vsel %vm448, %v450, %v446
        %v452 = vmul.f32 1.0, %v451
        %v453 = vrcp.pop %v407
        %v454 = vmul.f32 %v407, %v453
        %v455 = vsub.f32 1.0, %v454
        %v456 = vmul.f32 %v453, %v455
        %v457 = vadd.f32 %v453, %v456
        %vm458 = vweird.f32 %v407
        %vm459 = vweird.f32 %v453
        %vm460 = vmor %vm458, %vm459
        %v461 = vsel %vm460, %v453, %v457
        %v462 = vand.u32 2147483647, %v407
        %vm463 = vcmp.eq.f32.partialorder %v462, 8.507059e+37
        %v464 = vand.u32 %v407, 2147483648
        %v465 = vor.u32 1.1754944e-38, %v464
        %v466 = vsel %vm463, %v465, %v461
        %v467 = vmul.f32 1.0, %v466
        %v468 = vmul.f32 %v263, %v422
        %v469 = vmul.f32 %v264, %v422
        %v470 = vmul.f32 %v265, %v437
        %v471 = vmul.f32 %v266, %v437
        %v472 = vmul.f32 %v267, %v452
        %v473 = vmul.f32 %v268, %v452
        %v474 = vmul.f32 %v269, %v467
        %v475 = vmul.f32 %v270, %v467
        %v476 = vadd.f32 %v468, %v470
        %v477 = vadd.f32 %v476, %v472
        %v478 = vadd.f32 %v477, %v474
        %v479 = vrot.slane %v478, 4
        %v480 = vadd.f32 %v478, %v479
        %v481 = vrot.slane %v480, 2
        %v482 = vadd.f32 %v480, %v481
        %v483 = vrot.slane %v482, 1
        %v484 = vadd.f32 %v482, %v483
        %v485 = vadd.f32 %v469, %v471
        %v486 = vadd.f32 %v485, %v473
        %v487 = vadd.f32 %v486, %v475
        %v488 = vrot.slane %v487, 4
        %v489 = vadd.f32 %v487, %v488
        %v490 = vrot.slane %v489, 2
        %v491 = vadd.f32 %v489, %v490
        %v492 = vrot.slane %v491, 1
        %v493 = vadd.f32 %v491, %v492
        %v494 = vmul.f32 %v484, 0.03125
        %v495 = vmul.f32 %v493, 0.03125
        %v496 = vmax.f32 %v468, %v472
        %v497 = vmax.f32 %v470, %v474
        %v498 = vmax.f32 %v496, %v497
        %v499 = vrot.slane %v498, 4
        %v500 = vmax.f32 %v498, %v499
        %v501 = vrot.slane %v500, 2
        %v502 = vmax.f32 %v500, %v501
        %v503 = vrot.slane %v502, 1
        %v504 = vmax.f32 %v502, %v503
        %v505 = vmax.f32 %v469, %v473
        %v506 = vmax.f32 %v471, %v475
        %v507 = vmax.f32 %v505, %v506
        %v508 = vrot.slane %v507, 4
        %v509 = vmax.f32 %v507, %v508
        %v510 = vrot.slane %v509, 2
        %v511 = vmax.f32 %v509, %v510
        %v512 = vrot.slane %v511, 1
        %v513 = vmax.f32 %v511, %v512
        %v514 = vld [vmem:[#allocation6] sm:$0xff]
        %v515 = vld [vmem:[#allocation6 + $0x8] sm:$0xff]
        %v516 = vld [vmem:[#allocation6 + $0x10] sm:$0xff]
        %v517 = vld [vmem:[#allocation6 + $0x18] sm:$0xff]
        %v518 = vld [vmem:[#allocation6 + $0x20] sm:$0xff]
        %v519 = vld [vmem:[#allocation6 + $0x28] sm:$0xff]
        %v520 = vld [vmem:[#allocation6 + $0x30] sm:$0xff]
        %v521 = vld [vmem:[#allocation6 + $0x38] sm:$0xff]
        %v522 = vld [vmem:[#allocation6 + $0x40] sm:$0xff]
        %v523 = vld [vmem:[#allocation6 + $0x48] sm:$0xff]
        %v524 = vld [vmem:[#allocation6 + $0x50] sm:$0xff]
        %v525 = vld [vmem:[#allocation6 + $0x58] sm:$0xff]
        %v526 = vld [vmem:[#allocation6 + $0x60] sm:$0xff]
        %v527 = vld [vmem:[#allocation6 + $0x68] sm:$0xff]
        %v528 = vld [vmem:[#allocation6 + $0x70] sm:$0xff]
        %v529 = vld [vmem:[#allocation6 + $0x78] sm:$0xff]
        %v530 = vld [vmem:[#allocation6 + $0x80] sm:$0xff]
        %v531 = vld [vmem:[#allocation6 + $0x88] sm:$0xff]
        %v532 = vld [vmem:[#allocation6 + $0x90] sm:$0xff]
        %v533 = vld [vmem:[#allocation6 + $0x98] sm:$0xff]
        %v534 = vld [vmem:[#allocation6 + $0xa0] sm:$0xff]
        %v535 = vld [vmem:[#allocation6 + $0xa8] sm:$0xff]
        %v536 = vld [vmem:[#allocation6 + $0xb0] sm:$0xff]
        %v537 = vld [vmem:[#allocation6 + $0xb8] sm:$0xff]
        %v538 = vld [vmem:[#allocation6 + $0xc0] sm:$0xff]
        %v539 = vld [vmem:[#allocation6 + $0xc8] sm:$0xff]
        %v540 = vld [vmem:[#allocation6 + $0xd0] sm:$0xff]
        %v541 = vld [vmem:[#allocation6 + $0xd8] sm:$0xff]
        %v542 = vld [vmem:[#allocation6 + $0xe0] sm:$0xff]
        %v543 = vld [vmem:[#allocation6 + $0xe8] sm:$0xff]
        %v544 = vld [vmem:[#allocation6 + $0xf0] sm:$0xff]
        %v545 = vld [vmem:[#allocation6 + $0xf8] sm:$0xff]
        %v546 = vld [vmem:[#allocation6 + $0x100] sm:$0xff]
        %v547 = vld [vmem:[#allocation6 + $0x108] sm:$0xff]
        %v548 = vld [vmem:[#allocation6 + $0x110] sm:$0xff]
        %v549 = vld [vmem:[#allocation6 + $0x118] sm:$0xff]
        %v550 = vld [vmem:[#allocation6 + $0x120] sm:$0xff]
        %v551 = vld [vmem:[#allocation6 + $0x128] sm:$0xff]
        %v552 = vld [vmem:[#allocation6 + $0x130] sm:$0xff]
        %v553 = vld [vmem:[#allocation6 + $0x138] sm:$0xff]
        %v554 = vld [vmem:[#allocation6 + $0x140] sm:$0xff]
        %v555 = vld [vmem:[#allocation6 + $0x148] sm:$0xff]
        %v556 = vld [vmem:[#allocation6 + $0x150] sm:$0xff]
        %v557 = vld [vmem:[#allocation6 + $0x158] sm:$0xff]
        %v558 = vld [vmem:[#allocation6 + $0x160] sm:$0xff]
        %v559 = vld [vmem:[#allocation6 + $0x168] sm:$0xff]
        %v560 = vld [vmem:[#allocation6 + $0x170] sm:$0xff]
        %v561 = vld [vmem:[#allocation6 + $0x178] sm:$0xff]
        %v562 = vld [vmem:[#allocation6 + $0x180] sm:$0xff]
        %v563 = vld [vmem:[#allocation6 + $0x188] sm:$0xff]
        %v564 = vld [vmem:[#allocation6 + $0x190] sm:$0xff]
        %v565 = vld [vmem:[#allocation6 + $0x198] sm:$0xff]
        %v566 = vld [vmem:[#allocation6 + $0x1a0] sm:$0xff]
        %v567 = vld [vmem:[#allocation6 + $0x1a8] sm:$0xff]
        %v568 = vld [vmem:[#allocation6 + $0x1b0] sm:$0xff]
        %v569 = vld [vmem:[#allocation6 + $0x1b8] sm:$0xff]
        %v570 = vld [vmem:[#allocation6 + $0x1c0] sm:$0xff]
        %v571 = vld [vmem:[#allocation6 + $0x1c8] sm:$0xff]
        %v572 = vld [vmem:[#allocation6 + $0x1d0] sm:$0xff]
        %v573 = vld [vmem:[#allocation6 + $0x1d8] sm:$0xff]
        %v574 = vld [vmem:[#allocation6 + $0x1e0] sm:$0xff]
        %v575 = vld [vmem:[#allocation6 + $0x1e8] sm:$0xff]
        %v576 = vld [vmem:[#allocation6 + $0x1f0] sm:$0xff]
        %v577 = vld [vmem:[#allocation6 + $0x1f8] sm:$0xff]
        %v578 = vld [vmem:[#allocation6 + $0x200] sm:$0xff]
        %v579 = vld [vmem:[#allocation6 + $0x208] sm:$0xff]
        %v580 = vld [vmem:[#allocation6 + $0x210] sm:$0xff]
        %v581 = vld [vmem:[#allocation6 + $0x218] sm:$0xff]
        %v582 = vld [vmem:[#allocation6 + $0x220] sm:$0xff]
        %v583 = vld [vmem:[#allocation6 + $0x228] sm:$0xff]
        %v584 = vld [vmem:[#allocation6 + $0x230] sm:$0xff]
        %v585 = vld [vmem:[#allocation6 + $0x238] sm:$0xff]
        %v586 = vld [vmem:[#allocation6 + $0x240] sm:$0xff]
        %v587 = vld [vmem:[#allocation6 + $0x248] sm:$0xff]
        %v588 = vld [vmem:[#allocation6 + $0x250] sm:$0xff]
        %v589 = vld [vmem:[#allocation6 + $0x258] sm:$0xff]
        %v590 = vld [vmem:[#allocation6 + $0x260] sm:$0xff]
        %v591 = vld [vmem:[#allocation6 + $0x268] sm:$0xff]
        %v592 = vld [vmem:[#allocation6 + $0x270] sm:$0xff]
        %v593 = vld [vmem:[#allocation6 + $0x278] sm:$0xff]
        %v594 = vld [vmem:[#allocation6 + $0x280] sm:$0xff]
        %v595 = vld [vmem:[#allocation6 + $0x288] sm:$0xff]
        %v596 = vld [vmem:[#allocation6 + $0x290] sm:$0xff]
        %v597 = vld [vmem:[#allocation6 + $0x298] sm:$0xff]
        %v598 = vld [vmem:[#allocation6 + $0x2a0] sm:$0xff]
        %v599 = vld [vmem:[#allocation6 + $0x2a8] sm:$0xff]
        %v600 = vld [vmem:[#allocation6 + $0x2b0] sm:$0xff]
        %v601 = vld [vmem:[#allocation6 + $0x2b8] sm:$0xff]
        %v602 = vld [vmem:[#allocation6 + $0x2c0] sm:$0xff]
        %v603 = vld [vmem:[#allocation6 + $0x2c8] sm:$0xff]
        %v604 = vld [vmem:[#allocation6 + $0x2d0] sm:$0xff]
        %v605 = vld [vmem:[#allocation6 + $0x2d8] sm:$0xff]
        %v606 = vld [vmem:[#allocation6 + $0x2e0] sm:$0xff]
        %v607 = vld [vmem:[#allocation6 + $0x2e8] sm:$0xff]
        %v608 = vld [vmem:[#allocation6 + $0x2f0] sm:$0xff]
        %v609 = vld [vmem:[#allocation6 + $0x2f8] sm:$0xff]
        %v610 = vld [vmem:[#allocation6 + $0x300] sm:$0xff]
        %v611 = vld [vmem:[#allocation6 + $0x308] sm:$0xff]
        %v612 = vld [vmem:[#allocation6 + $0x310] sm:$0xff]
        %v613 = vld [vmem:[#allocation6 + $0x318] sm:$0xff]
        %v614 = vld [vmem:[#allocation6 + $0x320] sm:$0xff]
        %v615 = vld [vmem:[#allocation6 + $0x328] sm:$0xff]
        %v616 = vld [vmem:[#allocation6 + $0x330] sm:$0xff]
        %v617 = vld [vmem:[#allocation6 + $0x338] sm:$0xff]
        %v618 = vld [vmem:[#allocation6 + $0x340] sm:$0xff]
        %v619 = vld [vmem:[#allocation6 + $0x348] sm:$0xff]
        %v620 = vld [vmem:[#allocation6 + $0x350] sm:$0xff]
        %v621 = vld [vmem:[#allocation6 + $0x358] sm:$0xff]
        %v622 = vld [vmem:[#allocation6 + $0x360] sm:$0xff]
        %v623 = vld [vmem:[#allocation6 + $0x368] sm:$0xff]
        %v624 = vld [vmem:[#allocation6 + $0x370] sm:$0xff]
        %v625 = vld [vmem:[#allocation6 + $0x378] sm:$0xff]
        %v626 = vld [vmem:[#allocation6 + $0x380] sm:$0xff]
        %v627 = vld [vmem:[#allocation6 + $0x388] sm:$0xff]
        %v628 = vld [vmem:[#allocation6 + $0x390] sm:$0xff]
        %v629 = vld [vmem:[#allocation6 + $0x398] sm:$0xff]
        %v630 = vld [vmem:[#allocation6 + $0x3a0] sm:$0xff]
        %v631 = vld [vmem:[#allocation6 + $0x3a8] sm:$0xff]
        %v632 = vld [vmem:[#allocation6 + $0x3b0] sm:$0xff]
        %v633 = vld [vmem:[#allocation6 + $0x3b8] sm:$0xff]
        %v634 = vld [vmem:[#allocation6 + $0x3c0] sm:$0xff]
        %v635 = vld [vmem:[#allocation6 + $0x3c8] sm:$0xff]
        %v636 = vld [vmem:[#allocation6 + $0x3d0] sm:$0xff]
        %v637 = vld [vmem:[#allocation6 + $0x3d8] sm:$0xff]
        %v638 = vld [vmem:[#allocation6 + $0x3e0] sm:$0xff]
        %v639 = vld [vmem:[#allocation6 + $0x3e8] sm:$0xff]
        %v640 = vld [vmem:[#allocation6 + $0x3f0] sm:$0xff]
        %v641 = vld [vmem:[#allocation6 + $0x3f8] sm:$0xff]
        %s642 = sld [smem:[#allocation2]]
        %v643 = vstv %s642
        %644 = vmatpush.msra.mxu0 %v544
        %645 = vmatpush.msra.mxu0 %v542
        %646 = vmatpush.msra.mxu0 %v540
        %647 = vmatpush.msra.mxu0 %v538
        %648 = vmatpush.msra.mxu0 %v536
        %649 = vmatpush.msra.mxu0 %v534
        %650 = vmatpush.msra.mxu0 %v532
        %651 = vmatpush.msra.mxu0 %v530
        %652 = vmatpush.msra.mxu0 %v528
        %653 = vmatpush.msra.mxu0 %v526
        %654 = vmatpush.msra.mxu0 %v524
        %655 = vmatpush.msra.mxu0 %v522
        %656 = vmatpush.msra.mxu0 %v520
        %657 = vmatpush.msra.mxu0 %v518
        %658 = vmatpush.msra.mxu0 %v516
        %659 = vmatpush.msra.mxu0 %v514
        %660 = vmatmul.f32.gmra.mxu0 %v494
        %v661 = vpop.f32.mrf.mxu0
        %v662 = vadd.f32 %v643, %v661
        %663 = vdwg.mxu0
        %664 = vmatpush.msra.mxu0 %v576
        %665 = vmatpush.msra.mxu0 %v574
        %666 = vmatpush.msra.mxu0 %v572
        %667 = vmatpush.msra.mxu0 %v570
        %668 = vmatpush.msra.mxu0 %v568
        %669 = vmatpush.msra.mxu0 %v566
        %670 = vmatpush.msra.mxu0 %v564
        %671 = vmatpush.msra.mxu0 %v562
        %672 = vmatpush.msra.mxu0 %v560
        %673 = vmatpush.msra.mxu0 %v558
        %674 = vmatpush.msra.mxu0 %v556
        %675 = vmatpush.msra.mxu0 %v554
        %676 = vmatpush.msra.mxu0 %v552
        %677 = vmatpush.msra.mxu0 %v550
        %678 = vmatpush.msra.mxu0 %v548
        %679 = vmatpush.msra.mxu0 %v546
        %680 = vmatmul.f32.gmra.mxu0 %v495
        %v681 = vpop.f32.mrf.mxu0
        %v682 = vadd.f32 %v662, %v681
        %683 = vdwg.mxu0
        %684 = vmatpush.msra.mxu0 %v608
        %685 = vmatpush.msra.mxu0 %v606
        %686 = vmatpush.msra.mxu0 %v604
        %687 = vmatpush.msra.mxu0 %v602
        %688 = vmatpush.msra.mxu0 %v600
        %689 = vmatpush.msra.mxu0 %v598
        %690 = vmatpush.msra.mxu0 %v596
        %691 = vmatpush.msra.mxu0 %v594
        %692 = vmatpush.msra.mxu0 %v592
        %693 = vmatpush.msra.mxu0 %v590
        %694 = vmatpush.msra.mxu0 %v588
        %695 = vmatpush.msra.mxu0 %v586
        %696 = vmatpush.msra.mxu0 %v584
        %697 = vmatpush.msra.mxu0 %v582
        %698 = vmatpush.msra.mxu0 %v580
        %699 = vmatpush.msra.mxu0 %v578
        %700 = vmatmul.f32.gmra.mxu0 %v504
        %v701 = vpop.f32.mrf.mxu0
        %v702 = vadd.f32 %v682, %v701
        %703 = vdwg.mxu0
        %704 = vmatpush.msra.mxu0 %v640
        %705 = vmatpush.msra.mxu0 %v638
        %706 = vmatpush.msra.mxu0 %v636
        %707 = vmatpush.msra.mxu0 %v634
        %708 = vmatpush.msra.mxu0 %v632
        %709 = vmatpush.msra.mxu0 %v630
        %710 = vmatpush.msra.mxu0 %v628
        %711 = vmatpush.msra.mxu0 %v626
        %712 = vmatpush.msra.mxu0 %v624
        %713 = vmatpush.msra.mxu0 %v622
        %714 = vmatpush.msra.mxu0 %v620
        %715 = vmatpush.msra.mxu0 %v618
        %716 = vmatpush.msra.mxu0 %v616
        %717 = vmatpush.msra.mxu0 %v614
        %718 = vmatpush.msra.mxu0 %v612
        %719 = vmatpush.msra.mxu0 %v610
        %720 = vmatmul.f32.gmra.mxu0 %v513
        %v721 = vpop.f32.mrf.mxu0
        %v722 = vadd.f32 %v702, %v721
        %723 = vdwg.mxu0
        %724 = vmatpush.msra.mxu0 %v545
        %725 = vmatpush.msra.mxu0 %v543
        %726 = vmatpush.msra.mxu0 %v541
        %727 = vmatpush.msra.mxu0 %v539
        %728 = vmatpush.msra.mxu0 %v537
        %729 = vmatpush.msra.mxu0 %v535
        %730 = vmatpush.msra.mxu0 %v533
        %731 = vmatpush.msra.mxu0 %v531
        %732 = vmatpush.msra.mxu0 %v529
        %733 = vmatpush.msra.mxu0 %v527
        %734 = vmatpush.msra.mxu0 %v525
        %735 = vmatpush.msra.mxu0 %v523
        %736 = vmatpush.msra.mxu0 %v521
        %737 = vmatpush.msra.mxu0 %v519
        %738 = vmatpush.msra.mxu0 %v517
        %739 = vmatpush.msra.mxu0 %v515
        %740 = vmatmul.f32.gmra.mxu0 %v494
        %v741 = vpop.f32.mrf.mxu0
        %v742 = vadd.f32 %v643, %v741
        %743 = vdwg.mxu0
        %744 = vmatpush.msra.mxu0 %v577
        %745 = vmatpush.msra.mxu0 %v575
        %746 = vmatpush.msra.mxu0 %v573
        %747 = vmatpush.msra.mxu0 %v571
        %748 = vmatpush.msra.mxu0 %v569
        %749 = vmatpush.msra.mxu0 %v567
        %750 = vmatpush.msra.mxu0 %v565
        %751 = vmatpush.msra.mxu0 %v563
        %752 = vmatpush.msra.mxu0 %v561
        %753 = vmatpush.msra.mxu0 %v559
        %754 = vmatpush.msra.mxu0 %v557
        %755 = vmatpush.msra.mxu0 %v555
        %756 = vmatpush.msra.mxu0 %v553
        %757 = vmatpush.msra.mxu0 %v551
        %758 = vmatpush.msra.mxu0 %v549
        %759 = vmatpush.msra.mxu0 %v547
        %760 = vmatmul.f32.gmra.mxu0 %v495
        %v761 = vpop.f32.mrf.mxu0
        %v762 = vadd.f32 %v742, %v761
        %763 = vdwg.mxu0
        %764 = vmatpush.msra.mxu0 %v609
        %765 = vmatpush.msra.mxu0 %v607
        %766 = vmatpush.msra.mxu0 %v605
        %767 = vmatpush.msra.mxu0 %v603
        %768 = vmatpush.msra.mxu0 %v601
        %769 = vmatpush.msra.mxu0 %v599
        %770 = vmatpush.msra.mxu0 %v597
        %771 = vmatpush.msra.mxu0 %v595
        %772 = vmatpush.msra.mxu0 %v593
        %773 = vmatpush.msra.mxu0 %v591
        %774 = vmatpush.msra.mxu0 %v589
        %775 = vmatpush.msra.mxu0 %v587
        %776 = vmatpush.msra.mxu0 %v585
        %777 = vmatpush.msra.mxu0 %v583
        %778 = vmatpush.msra.mxu0 %v581
        %779 = vmatpush.msra.mxu0 %v579
        %780 = vmatmul.f32.gmra.mxu0 %v504
        %v781 = vpop.f32.mrf.mxu0
        %v782 = vadd.f32 %v762, %v781
        %783 = vdwg.mxu0
        %784 = vmatpush.msra.mxu0 %v641
        %785 = vmatpush.msra.mxu0 %v639
        %786 = vmatpush.msra.mxu0 %v637
        %787 = vmatpush.msra.mxu0 %v635
        %788 = vmatpush.msra.mxu0 %v633
        %789 = vmatpush.msra.mxu0 %v631
        %790 = vmatpush.msra.mxu0 %v629
        %791 = vmatpush.msra.mxu0 %v627
        %792 = vmatpush.msra.mxu0 %v625
        %793 = vmatpush.msra.mxu0 %v623
        %794 = vmatpush.msra.mxu0 %v621
        %795 = vmatpush.msra.mxu0 %v619
        %796 = vmatpush.msra.mxu0 %v617
        %797 = vmatpush.msra.mxu0 %v615
        %798 = vmatpush.msra.mxu0 %v613
        %799 = vmatpush.msra.mxu0 %v611
        %800 = vmatmul.f32.gmra.mxu0 %v513
        %v801 = vpop.f32.mrf.mxu0
        %v802 = vadd.f32 %v782, %v801
        %803 = vdwg.mxu0
        %v804 = vxor.u32 %v722, 2147483648
        %v805 = vxor.u32 %v802, 2147483648
        %v806 = vmul.f32 %v804, 1.442695
        %v807 = vpow.pop %v806
        %v808 = vmul.f32 %v805, 1.442695
        %v809 = vpow.pop %v808
        %v810 = vadd.f32 %v807, 1.0
        %v811 = vadd.f32 %v809, 1.0
        %v812 = vrcp.pop %v810
        %v813 = vmul.f32 %v810, %v812
        %v814 = vsub.f32 1.0, %v813
        %v815 = vmul.f32 %v812, %v814
        %v816 = vadd.f32 %v812, %v815
        %vm817 = vweird.f32 %v810
        %vm818 = vweird.f32 %v812
        %vm819 = vmor %vm817, %vm818
        %v820 = vsel %vm819, %v812, %v816
        %v821 = vand.u32 2147483647, %v810
        %vm822 = vcmp.eq.f32.partialorder %v821, 8.507059e+37
        %v823 = vand.u32 %v810, 2147483648
        %v824 = vor.u32 1.1754944e-38, %v823
        %v825 = vsel %vm822, %v824, %v820
        %v826 = vmul.f32 1.0, %v825
        %v827 = vrcp.pop %v811
        %v828 = vmul.f32 %v811, %v827
        %v829 = vsub.f32 1.0, %v828
        %v830 = vmul.f32 %v827, %v829
        %v831 = vadd.f32 %v827, %v830
        %vm832 = vweird.f32 %v811
        %vm833 = vweird.f32 %v827
        %vm834 = vmor %vm832, %vm833
        %v835 = vsel %vm834, %v827, %v831
        %v836 = vand.u32 2147483647, %v811
        %vm837 = vcmp.eq.f32.partialorder %v836, 8.507059e+37
        %v838 = vand.u32 %v811, 2147483648
        %v839 = vor.u32 1.1754944e-38, %v838
        %v840 = vsel %vm837, %v839, %v835
        %v841 = vmul.f32 1.0, %v840
        %v842 = vperm.slane %v826, 0
        %v843 = vperm.slane %v841, 0
        %v844 = vmul.f32 %v468, %v842
        %v845 = vmul.f32 %v469, %v843
        %v846 = vmul.f32 %v470, %v842
        %v847 = vmul.f32 %v471, %v843
        %v848 = vmul.f32 %v472, %v842
        %v849 = vmul.f32 %v473, %v843
        %v850 = vmul.f32 %v474, %v842
        %v851 = vmul.f32 %v475, %v843
        %852 = vst [vmem:[%s262] sm:$0xff] %v844
        %853 = vst [vmem:[%s262 + $0x8] sm:$0xff] %v845
        %854 = vst [vmem:[%s262 + $0x10] sm:$0xff] %v846
        %855 = vst [vmem:[%s262 + $0x18] sm:$0xff] %v847
        %856 = vst [vmem:[%s262 + $0x20] sm:$0xff] %v848
        %857 = vst [vmem:[%s262 + $0x28] sm:$0xff] %v849
        %858 = vst [vmem:[%s262 + $0x30] sm:$0xff] %v850
        %859 = vst [vmem:[%s262 + $0x38] sm:$0xff] %v851
        %s860 = sand.u32 %s142, 1
        %s861 = scalar_lea.sflag [#allocation5], %s860
        %s862 = sand.u32 %s142, 1
        %s863 = smul.addr %s862, 64
        %s864 = scalar_lea.vmem [#allocation8], %s863
        // Predicated region
        $region49: #{tpu_custom_call.1} parent=39 // pred_check
          %p865 = pneg %p152
        $region50: #{tpu_custom_call.1} parent=39 // pred_check_branch
          %867 = sbr.rel (%p865) target = $region52
        $region51: #{tpu_custom_call.1} parent=39 // pred_region
          %869 = vsyncadd %s861, 0
          %s870 = smul.addr %s24, 8
          %s871 = smul.addr %s870, 8
          %s872 = scalar_lea.hbm %s5, %s871
          %s873 = sshll.u32 %s864, 4
          %s874 = int_to_ptr.vmem [resolvable:$true] %s873
          %s875 = sshll.u32 %s872, 4
          %s876 = int_to_ptr.hbm [resolvable:$true] %s875
          %881 = dma.vmem_to_hbm [thread:$0]  %s874, 1024, %s876, %s861, 256, 256, 16
        $region52: #{tpu_custom_call.1} parent=39 // pred_fallthru
          _
      $region40: #{tpu_custom_call.1} parent=5 // pred_fallthru
        _
      %p882 = scmp.le.s32.totalorder 2, %s19
      // Predicated region
      $region53: #{tpu_custom_call.1} parent=5 // pred_check
        %p883 = pneg %p882
      $region54: #{tpu_custom_call.1} parent=5 // pred_check_branch
        %885 = sbr.rel (%p883) target = $region56
      $region55: #{tpu_custom_call.1} parent=5 // pred_region
        %s886 = ssub.s32 %s19, 2
        // Predicated region
        $region57: #{tpu_custom_call.1} parent=55 // pred_check
          %p887 = pneg %p158
        $region58: #{tpu_custom_call.1} parent=55 // pred_check_branch
          %889 = sbr.rel (%p887) target = $region60
        $region59: #{tpu_custom_call.1} parent=55 // pred_region
          %s890 = sand.u32 %s143, 1
          %s891 = scalar_lea.sflag [#allocation5], %s890
          %s892 = sand.u32 %s143, 1
          %s893 = smul.addr %s892, 64
          %s894 = scalar_lea.vmem [#allocation8], %s893
          %896 = dma.done %s891, 1024
        $region60: #{tpu_custom_call.1} parent=55 // pred_fallthru
          _
      $region56: #{tpu_custom_call.1} parent=5 // pred_fallthru
        _
    $region6: #{tpu_custom_call.1} parent=1 // loop_footer
      %s23 = sadd.s32 1, %s19
    $region7: #{tpu_custom_call.1} parent=1 // loop_footer_branch
      %18 = sbr.rel target = $region3
    $region8: #{tpu_custom_call.1} parent=1 // loop_exit
      _
    %897 = vsyncpa [#allocation4], 1
    %s898 = scalar_lea.sflag [#allocation4], 1
    %899 = vsyncpa %s898, 1
    %900 = vsyncpa [#allocation7], 1
    %901 = vsyncpa [#allocation5], 1
    %s902 = scalar_lea.sflag [#allocation5], 1
    %903 = vsyncpa %s902, 1

</llo_original>
